<compile_context>
chip_gen: v5e
topology: v5e:2x2
jax: 0.10.0
libtpu: 0.0.40
codegen_flags: <defaults>
</compile_context>

<pallas_src>
import functools

import jax
import jax.numpy as jnp
from jax.experimental import pallas as pl
from jax.experimental.pallas import tpu as pltpu


def _standout_kernel(prev_ref, pi_ref, cur_ref, u_ref, o_ref, acc_ref, *,
                     alpha, beta, deterministic, n_k):
    """Grid = (M blocks, N blocks, K blocks).  K is the matmul reduction axis;
    the Standout epilogue (sigmoid -> Bernoulli mask -> multiply `current`)
    runs on the last K step."""

    @pl.when(pl.program_id(2) == 0)
    def _():
        acc_ref[...] = jnp.zeros_like(acc_ref)

    # previous_block (tm, tk) contracted with pi_block (tn, tk) -> (tm, tn).
    # Contraction on the last axis of both avoids any in-kernel transpose.
    acc_ref[...] += jax.lax.dot_general(
        prev_ref[...], pi_ref[...],
        dimension_numbers=(((1,), (1,)), ((), ())),
        preferred_element_type=jnp.float32)

    @pl.when(pl.program_id(2) == n_k - 1)
    def _():
        p = jax.nn.sigmoid(jnp.float32(alpha) * acc_ref[...] + jnp.float32(beta))
        cur = cur_ref[...].astype(jnp.float32)
        if deterministic:
            out = p * cur
        else:
            keep = (u_ref[...] < p).astype(jnp.float32)
            out = keep * cur
        o_ref[...] = out.astype(o_ref.dtype)


def _pick_tile(dim, cap):
    """Largest tile: the cap if it divides the dim, else the whole dim."""
    if dim <= cap or dim % cap != 0:
        return dim
    return cap


def standout(previous, pi, current, alpha, beta, *, key=None,
             deterministic=False):
    """previous: (B, Din), pi: (Dout, Din) (last layer's weight),
    current: (B, Dout).  Returns mask * current (or p * current)."""
    B, Din = previous.shape
    Dout, Din2 = pi.shape
    assert Din == Din2 and current.shape == (B, Dout)

    if key is None:
        key = jax.random.PRNGKey(0)
    # Uniforms drawn once in the wrapper (mirrors PyTorch sample_mask); this
    # keeps the kernel free of stateful-PRNG primitives and grid-order deps.
    uniform = jax.random.uniform(key, (B, Dout), dtype=jnp.float32)

    tm = _pick_tile(B, 256)
    tn = _pick_tile(Dout, 256)
    tk = _pick_tile(Din, 512)
    n_k = Din // tk

    kernel = functools.partial(
        _standout_kernel, alpha=float(alpha), beta=float(beta),
        deterministic=bool(deterministic), n_k=n_k)

    # TODO(synk): the PyTorch `torch.mean(self.p) == 0` fallback is a
    # data-dependent host-side branch; sigmoid output is strictly positive for
    # finite inputs, so the branch is unreachable and is not reproduced here.

    out_bytes = B * Dout * jnp.dtype(current.dtype).itemsize
    cost = pl.CostEstimate(
        flops=2 * B * Dout * Din + 4 * B * Dout,
        transcendentals=B * Dout,
        bytes_accessed=(previous.size * previous.dtype.itemsize
                        + pi.size * pi.dtype.itemsize
                        + current.size * current.dtype.itemsize
                        + uniform.size * uniform.dtype.itemsize
                        + out_bytes))

    return pl.pallas_call(
        kernel,
        out_shape=jax.ShapeDtypeStruct((B, Dout), current.dtype),
        grid_spec=pltpu.PrefetchScalarGridSpec(
            num_scalar_prefetch=0,
            grid=(B // tm, Dout // tn, n_k),
            in_specs=[
                pl.BlockSpec((tm, tk), lambda i, j, k: (i, k)),   # previous
                pl.BlockSpec((tn, tk), lambda i, j, k: (j, k)),   # pi (weight)
                pl.BlockSpec((tm, tn), lambda i, j, k: (i, j)),   # current
                pl.BlockSpec((tm, tn), lambda i, j, k: (i, j)),   # uniforms
            ],
            out_specs=pl.BlockSpec((tm, tn), lambda i, j, k: (i, j)),
            scratch_shapes=[pltpu.VMEM((tm, tn), jnp.float32)],   # f32 matmul acc
        ),
        compiler_params=pltpu.CompilerParams(
            dimension_semantics=("parallel", "parallel", "arbitrary"),
        ),
        cost_estimate=cost,
    )(previous, pi, current, uniform)


if __name__ == "__main__":
    key = jax.random.PRNGKey(0)
    k_prev, k_pi, k_cur, k_mask = jax.random.split(key, 4)

    B, Din, Dout = 8, 32, 32        # batch=8, in_features=32, out_features=32
    alpha, beta = 1.0, 0.5

    previous = jax.random.normal(k_prev, (B, Din), dtype=jnp.float32)
    pi = jax.random.normal(k_pi, (Dout, Din), dtype=jnp.float32) * 0.1
    current = jax.random.normal(k_cur, (B, Dout), dtype=jnp.float32)

    out = standout(previous, pi, current, alpha, beta, key=k_mask,
                   deterministic=False)
    out = jax.block_until_ready(out)

    out_det = standout(previous, pi, current, alpha, beta, key=k_mask,
                       deterministic=True)
    out_det = jax.block_until_ready(out_det)

    # Pure-JAX reference for Standout semantics.
    p_ref = jax.nn.sigmoid(
        alpha * jnp.dot(previous, pi.T, precision=jax.lax.Precision.HIGHEST)
        + beta)
    uniform = jax.random.uniform(k_mask, (B, Dout), dtype=jnp.float32)
    ref_train = jnp.where(uniform < p_ref, current, jnp.zeros_like(current))
    ref_det = p_ref * current

    assert out.shape == current.shape and out.dtype == current.dtype
    assert out_det.shape == current.shape and out_det.dtype == current.dtype

    # Deterministic path: p * current.
    assert bool(jnp.allclose(out_det, ref_det, atol=1e-4, rtol=1e-4))

    # Training path: every element is either dropped (0) or passed unscaled.
    passthrough = jnp.isclose(out, current, atol=1e-6, rtol=1e-6)
    dropped = jnp.abs(out) <= 1e-6
    assert bool(jnp.all(passthrough | dropped))

    # Mask agrees with the reference (tolerate rare u ~ p rounding flips from
    # MXU vs HIGHEST-precision matmul differences).
    mismatch = jnp.mean(
        (jnp.abs(out - ref_train) > 1e-3 * (1.0 + jnp.abs(ref_train))).astype(
            jnp.float32))
    assert float(mismatch) < 0.02

    print("KERNEL_OK")
</pallas_src>

<mosaic_0001>
module attributes {stable_mosaic.version = 11 : i64} {
  func.func @_standout_kernel(%arg0: i32, %arg1: i32, %arg2: i32, %arg3: memref<8x32xf32, #tpu.memory_space<vmem>>, %arg4: memref<32x32xf32, #tpu.memory_space<vmem>>, %arg5: memref<8x32xf32, #tpu.memory_space<vmem>>, %arg6: memref<8x32xf32, #tpu.memory_space<vmem>>, %arg7: memref<8x32xf32, #tpu.memory_space<vmem>>, %arg8: memref<8x32xf32, #tpu.memory_space<vmem>>) attributes {dimension_semantics = [#tpu.dimension_semantics<parallel>, #tpu.dimension_semantics<parallel>, #tpu.dimension_semantics<arbitrary>], iteration_bounds = array<i64: 1, 1, 1>, scalar_prefetch = 0 : i64, scratch_operands = 1 : i64, tpu.core_type = #tpu.core_type<tc>, window_params = [{transform_indices = @transform_0, window_bounds = array<i64: 8, 32>}, {transform_indices = @transform_1, window_bounds = array<i64: 32, 32>}, {transform_indices = @transform_2, window_bounds = array<i64: 8, 32>}, {transform_indices = @transform_3, window_bounds = array<i64: 8, 32>}, {transform_indices = @transform_4, window_bounds = array<i64: 8, 32>}]} {
    %c0_i32 = arith.constant 0 : i32
    %0 = arith.cmpi eq, %arg2, %c0_i32 : i32
    %1 = arith.extui %0 : i1 to i32
    %c0_i32_0 = arith.constant 0 : i32
    %2 = arith.cmpi ne, %1, %c0_i32_0 : i32
    scf.if %2 {
      %cst_10 = arith.constant 0.000000e+00 : f32
      %12 = vector.broadcast %cst_10 : f32 to vector<8x32xf32>
      %c0_11 = arith.constant 0 : index
      %c0_12 = arith.constant 0 : index
      %13 = vector.load %arg8[%c0_11, %c0_12] : memref<8x32xf32, #tpu.memory_space<vmem>>, vector<8x32xf32>
      tpu.vector_store %arg8[%c0_11, %c0_12], %12 {strides = array<i32>} : memref<8x32xf32, #tpu.memory_space<vmem>>, vector<8x32xf32>,
    } else {
    }
    %c0 = arith.constant 0 : index
    %c0_1 = arith.constant 0 : index
    %3 = vector.load %arg8[%c0, %c0_1] : memref<8x32xf32, #tpu.memory_space<vmem>>, vector<8x32xf32>
    %c0_2 = arith.constant 0 : index
    %c0_3 = arith.constant 0 : index
    %4 = vector.load %arg3[%c0_2, %c0_3] : memref<8x32xf32, #tpu.memory_space<vmem>>, vector<8x32xf32>
    %c0_4 = arith.constant 0 : index
    %c0_5 = arith.constant 0 : index
    %5 = vector.load %arg4[%c0_4, %c0_5] : memref<32x32xf32, #tpu.memory_space<vmem>>, vector<32x32xf32>
    %cst = arith.constant dense<0.000000e+00> : vector<8x32xf32>
    %6 = tpu.matmul %4, %5, %cst {dimension_numbers = #tpu.dot_dimension_numbers<[1], [1], [0], [0], [0, 0, 1, 0], [], []>} : vector<8x32xf32>, vector<32x32xf32>, vector<8x32xf32> -> vector<8x32xf32>
    %7 = arith.addf %3, %6 : vector<8x32xf32>
    %c0_6 = arith.constant 0 : index
    %c0_7 = arith.constant 0 : index
    %8 = vector.load %arg8[%c0_6, %c0_7] : memref<8x32xf32, #tpu.memory_space<vmem>>, vector<8x32xf32>
    tpu.vector_store %arg8[%c0_6, %c0_7], %7 {strides = array<i32>} : memref<8x32xf32, #tpu.memory_space<vmem>>, vector<8x32xf32>,
    %c0_i32_8 = arith.constant 0 : i32
    %9 = arith.cmpi eq, %arg2, %c0_i32_8 : i32
    %10 = arith.extui %9 : i1 to i32
    %c0_i32_9 = arith.constant 0 : i32
    %11 = arith.cmpi ne, %10, %c0_i32_9 : i32
    scf.if %11 {
      %c0_10 = arith.constant 0 : index
      %c0_11 = arith.constant 0 : index
      %12 = vector.load %arg8[%c0_10, %c0_11] : memref<8x32xf32, #tpu.memory_space<vmem>>, vector<8x32xf32>
      %cst_12 = arith.constant 1.000000e+00 : f32
      %13 = vector.broadcast %cst_12 : f32 to vector<8x32xf32>
      %14 = arith.mulf %13, %12 : vector<8x32xf32>
      %cst_13 = arith.constant 5.000000e-01 : f32
      %15 = vector.broadcast %cst_13 : f32 to vector<8x32xf32>
      %16 = arith.addf %14, %15 : vector<8x32xf32>
      %17 = arith.negf %16 : vector<8x32xf32>
      %18 = math.exp %17 : vector<8x32xf32>
      %cst_14 = arith.constant 1.000000e+00 : f32
      %19 = vector.broadcast %cst_14 : f32 to vector<8x32xf32>
      %20 = arith.addf %19, %18 : vector<8x32xf32>
      %21 = arith.divf %19, %20 : vector<8x32xf32>
      %c0_15 = arith.constant 0 : index
      %c0_16 = arith.constant 0 : index
      %22 = vector.load %arg5[%c0_15, %c0_16] : memref<8x32xf32, #tpu.memory_space<vmem>>, vector<8x32xf32>
      %c0_17 = arith.constant 0 : index
      %c0_18 = arith.constant 0 : index
      %23 = vector.load %arg6[%c0_17, %c0_18] : memref<8x32xf32, #tpu.memory_space<vmem>>, vector<8x32xf32>
      %24 = arith.cmpf olt, %23, %21 : vector<8x32xf32>
      %25 = arith.extui %24 : vector<8x32xi1> to vector<8x32xi32>
      %26 = arith.sitofp %25 : vector<8x32xi32> to vector<8x32xf32>
      %27 = arith.mulf %26, %22 : vector<8x32xf32>
      %c0_19 = arith.constant 0 : index
      %c0_20 = arith.constant 0 : index
      %28 = vector.load %arg7[%c0_19, %c0_20] : memref<8x32xf32, #tpu.memory_space<vmem>>, vector<8x32xf32>
      tpu.vector_store %arg7[%c0_19, %c0_20], %27 {strides = array<i32>} : memref<8x32xf32, #tpu.memory_space<vmem>>, vector<8x32xf32>,
    } else {
    }
    return
  }
  func.func @transform_0(%arg0: i32, %arg1: i32, %arg2: i32) -> (i32, i32) {
    %c0_i32 = arith.constant 0 : i32
    return %arg0, %arg2 : i32, i32
  }
  func.func @transform_1(%arg0: i32, %arg1: i32, %arg2: i32) -> (i32, i32) {
    %c0_i32 = arith.constant 0 : i32
    return %arg1, %arg2 : i32, i32
  }
  func.func @transform_2(%arg0: i32, %arg1: i32, %arg2: i32) -> (i32, i32) {
    %c0_i32 = arith.constant 0 : i32
    return %arg0, %arg1 : i32, i32
  }
  func.func @transform_3(%arg0: i32, %arg1: i32, %arg2: i32) -> (i32, i32) {
    %c0_i32 = arith.constant 0 : i32
    return %arg0, %arg1 : i32, i32
  }
  func.func @transform_4(%arg0: i32, %arg1: i32, %arg2: i32) -> (i32, i32) {
    %c0_i32 = arith.constant 0 : i32
    return %arg0, %arg1 : i32, i32
  }
}

</mosaic_0001>

<llo_original>
// kernel: tpu_custom_call.1
$region0: #{tpu_custom_call.1}
  #allocation0 [shape = 'u32[]', space=smem, size = 0x4, offset = 0x4, fixed_abs, tag = 'smem constant byte address 0x4 - core index']
  #allocation1 [shape = 'u32[72,128]{1,0:T(1,128)}', space=vmem, size = 0x9000, scoped, tag = 'internal scratch']
  #allocation2 [shape = 'f32[8,32]{1,0:T(8,128)}', space=vmem, size = 0x1000, scoped, tag = 'scratch operand']
  %s0 = inlined_call_operand.hbm [shape: f32[8,32], index: 0, kind: input, shape index: {}]
  %s1 = inlined_call_operand.hbm [shape: f32[32,32], index: 1, kind: input, shape index: {}]
  %s2 = inlined_call_operand.hbm [shape: f32[8,32], index: 2, kind: input, shape index: {}]
  %s3 = inlined_call_operand.hbm [shape: f32[8,32], index: 3, kind: input, shape index: {}]
  %s4 = inlined_call_operand.hbm [shape: f32[8,32], index: 4, kind: output, shape index: {}]
  %s5 = sld [smem:[#allocation0]]
  $region50: #{tpu_custom_call.1} parent=0
    _
  %s7 = ssub.s32 1, %s5
  %s8 = scalar_select 0, %s7, %s5
  $region1: #{tpu_custom_call.1} parent=0
    #allocation3 [shape = 'u8[4096]{0}', space=vmem, size = 0x1000, scoped, tag = 'input window, operand 0, single buffered']
    #allocation4 [shape = 's32[1]{0}', space=sflag, size = 0x4, scoped, tag = 'scoped memory for tpu_custom_call.1']
    #allocation5 [shape = 's32[1]{0}', space=sflag, size = 0x4, scoped, tag = 'scoped memory for tpu_custom_call.1']
    #allocation6 [shape = 'u8[16384]{0}', space=vmem, size = 0x4000, scoped, tag = 'input window, operand 1, single buffered']
    #allocation7 [shape = 's32[1]{0}', space=sflag, size = 0x4, scoped, tag = 'scoped memory for tpu_custom_call.1']
    #allocation8 [shape = 'u8[4096]{0}', space=vmem, size = 0x1000, scoped, tag = 'input window, operand 2, single buffered']
    #allocation9 [shape = 'u8[4096]{0}', space=vmem, size = 0x1000, scoped, tag = 'input window, operand 3, single buffered']
    #allocation10 [shape = 's32[1]{0}', space=sflag, size = 0x4, scoped, tag = 'scoped memory for tpu_custom_call.1']
    #allocation11 [shape = 'u8[4096]{0}', space=vmem, size = 0x1000, scoped, tag = 'output window, operand 0, single buffered']
    %9 = vsyncpa [#allocation4], 0
    %10 = vsyncpa [#allocation7], 0
    %11 = vsyncpa [#allocation10], 0
    %12 = vsyncpa [#allocation5], 0
    // Predicated region
    $region2: #{tpu_custom_call.1} parent=1 // pred_check
      _
    $region3: #{tpu_custom_call.1} parent=1 // pred_check_branch
      %14 = sbr.rel (0) target = $region5
    $region4: #{tpu_custom_call.1} parent=1 // pred_region
      %16 = vsyncadd [#allocation4], 0
      %s18 = sshll.u32 %s0, 4
      %s19 = int_to_ptr.hbm [resolvable:$true] %s18
      %s20 = sshll.u32 [#allocation3], 4
      %s21 = int_to_ptr.vmem [resolvable:$true] %s20
      %23 = dma.hbm_to_vmem [thread:$0]  %s19, 128, %s21, [#allocation4]
    $region5: #{tpu_custom_call.1} parent=1 // pred_fallthru
      _
    // Predicated region
    $region6: #{tpu_custom_call.1} parent=1 // pred_check
      _
    $region7: #{tpu_custom_call.1} parent=1 // pred_check_branch
      %25 = sbr.rel (0) target = $region9
    $region8: #{tpu_custom_call.1} parent=1 // pred_region
      %27 = vsyncadd [#allocation7], 0
      %s28 = sshll.u32 %s1, 4
      %s29 = int_to_ptr.hbm [resolvable:$true] %s28
      %s30 = sshll.u32 [#allocation6], 4
      %s31 = int_to_ptr.vmem [resolvable:$true] %s30
      %36 = dma.hbm_to_vmem [thread:$0]  %s29, 512, %s31, [#allocation7], 128, 128, 8
    $region9: #{tpu_custom_call.1} parent=1 // pred_fallthru
      _
    // Predicated region
    $region10: #{tpu_custom_call.1} parent=1 // pred_check
      _
    $region11: #{tpu_custom_call.1} parent=1 // pred_check_branch
      %38 = sbr.rel (0) target = $region13
    $region12: #{tpu_custom_call.1} parent=1 // pred_region
      %40 = vsyncadd [#allocation7], 0
      %s42 = sshll.u32 %s2, 4
      %s43 = int_to_ptr.hbm [resolvable:$true] %s42
      %s44 = sshll.u32 [#allocation8], 4
      %s45 = int_to_ptr.vmem [resolvable:$true] %s44
      %47 = dma.hbm_to_vmem [thread:$0]  %s43, 128, %s45, [#allocation7]
    $region13: #{tpu_custom_call.1} parent=1 // pred_fallthru
      _
    // Predicated region
    $region14: #{tpu_custom_call.1} parent=1 // pred_check
      _
    $region15: #{tpu_custom_call.1} parent=1 // pred_check_branch
      %49 = sbr.rel (0) target = $region17
    $region16: #{tpu_custom_call.1} parent=1 // pred_region
      %51 = vsyncadd [#allocation10], 0
      %s53 = sshll.u32 %s3, 4
      %s54 = int_to_ptr.hbm [resolvable:$true] %s53
      %s55 = sshll.u32 [#allocation9], 4
      %s56 = int_to_ptr.vmem [resolvable:$true] %s55
      %58 = dma.hbm_to_vmem [thread:$0]  %s54, 128, %s56, [#allocation10]
    $region17: #{tpu_custom_call.1} parent=1 // pred_fallthru
      _
    // Predicated region
    $region18: #{tpu_custom_call.1} parent=1 // pred_check
      _
    $region19: #{tpu_custom_call.1} parent=1 // pred_check_branch
      %60 = sbr.rel (0) target = $region21
    $region20: #{tpu_custom_call.1} parent=1 // pred_region
      %62 = dma.done [#allocation4], 128
    $region21: #{tpu_custom_call.1} parent=1 // pred_fallthru
      _
    // Predicated region
    $region22: #{tpu_custom_call.1} parent=1 // pred_check
      _
    $region23: #{tpu_custom_call.1} parent=1 // pred_check_branch
      %64 = sbr.rel (0) target = $region25
    $region24: #{tpu_custom_call.1} parent=1 // pred_region
      %66 = dma.done [#allocation7], 512
    $region25: #{tpu_custom_call.1} parent=1 // pred_fallthru
      _
    // Predicated region
    $region26: #{tpu_custom_call.1} parent=1 // pred_check
      _
    $region27: #{tpu_custom_call.1} parent=1 // pred_check_branch
      %68 = sbr.rel (0) target = $region29
    $region28: #{tpu_custom_call.1} parent=1 // pred_region
      %70 = dma.done [#allocation7], 128
    $region29: #{tpu_custom_call.1} parent=1 // pred_fallthru
      _
    // Predicated region
    $region30: #{tpu_custom_call.1} parent=1 // pred_check
      _
    $region31: #{tpu_custom_call.1} parent=1 // pred_check_branch
      %72 = sbr.rel (0) target = $region33
    $region32: #{tpu_custom_call.1} parent=1 // pred_region
      %74 = dma.done [#allocation10], 128
    $region33: #{tpu_custom_call.1} parent=1 // pred_fallthru
      _
    %p75 = scmp.eq.s32.totalorder 0, 0
    // Predicated region
    $region34: #{tpu_custom_call.1} parent=1 // pred_check
      %p76 = pneg %p75
    $region35: #{tpu_custom_call.1} parent=1 // pred_check_branch
      %78 = sbr.rel (%p76) target = $region37
    $region36: #{tpu_custom_call.1} parent=1 // pred_region
      %vm79 = vcmask 261120
      %80 = vst.msk [vmem:[#allocation2] sm:$0xff] %vm79, 0.0
    $region37: #{tpu_custom_call.1} parent=1 // pred_fallthru
      _
    %v81 = vld [vmem:[#allocation2] sm:$0xff]
    %v82 = vld [vmem:[#allocation3] sm:$0xff]
    %v83 = vld [vmem:[#allocation6] sm:$0xff]
    %v84 = vld [vmem:[#allocation6 + $0x8] sm:$0xff]
    %v85 = vld [vmem:[#allocation6 + $0x10] sm:$0xff]
    %v86 = vld [vmem:[#allocation6 + $0x18] sm:$0xff]
    %vm87 = vcmask 261120
    %v89 = vsel %vm87, %v82, 0
    %v92 = vsel %vm87, %v83, 0
    %v95 = vsel %vm87, %v84, 0
    %v98 = vsel %vm87, %v85, 0
    %v101 = vsel %vm87, %v86, 0
    %103 = vmatpush.xpose.msra.mxu0 0.0
    %104 = vmatpush.xpose.msra.mxu0 0.0
    %105 = vmatpush.xpose.msra.mxu0 0.0
    %106 = vmatpush.xpose.msra.mxu0 0.0
    %107 = vmatpush.xpose.msra.mxu0 0.0
    %108 = vmatpush.xpose.msra.mxu0 0.0
    %109 = vmatpush.xpose.msra.mxu0 0.0
    %110 = vmatpush.xpose.msra.mxu0 0.0
    %111 = vmatpush.xpose.msra.mxu0 0.0
    %112 = vmatpush.xpose.msra.mxu0 0.0
    %113 = vmatpush.xpose.msra.mxu0 0.0
    %114 = vmatpush.xpose.msra.mxu0 0.0
    %115 = vmatpush.xpose.msra.mxu0 %v101
    %116 = vmatpush.xpose.msra.mxu0 %v98
    %117 = vmatpush.xpose.msra.mxu0 %v95
    %118 = vmatpush.xpose.msra.mxu0 %v92
    %119 = vmatmul.f32.gmra.mxu0 %v89
    %v120 = vpop.f32.mrf.mxu0
    %v121 = vadd.f32 0.0, %v120
    %122 = vdwg.mxu0
    %v123 = vadd.f32 %v81, %v121
    %124 = vst.msk [vmem:[#allocation2] sm:$0xff] %vm87, %v123
    // Predicated region
    $region38: #{tpu_custom_call.1} parent=1 // pred_check
      %p125 = pneg %p75
    $region39: #{tpu_custom_call.1} parent=1 // pred_check_branch
      %127 = sbr.rel (%p125) target = $region41
    $region40: #{tpu_custom_call.1} parent=1 // pred_region
      %v128 = vld [vmem:[#allocation2] sm:$0xff]
      %v129 = vadd.f32 %v128, 0.5
      %v130 = vxor.u32 %v129, 2147483648
      %v131 = vmul.f32 %v130, 1.442695
      %v132 = vpow.pop %v131
      %v133 = vadd.f32 %v132, 1.0
      %v134 = vrcp.pop %v133
      %v135 = vmul.f32 %v133, %v134
      %v136 = vsub.f32 1.0, %v135
      %v137 = vmul.f32 %v134, %v136
      %v138 = vadd.f32 %v134, %v137
      %vm139 = vweird.f32 %v133
      %vm140 = vweird.f32 %v134
      %vm141 = vmor %vm139, %vm140
      %v142 = vsel %vm141, %v134, %v138
      %v143 = vand.u32 2147483647, %v133
      %vm144 = vcmp.eq.f32.partialorder %v143, 8.507059e+37
      %v145 = vand.u32 %v133, 2147483648
      %v146 = vor.u32 1.1754944e-38, %v145
      %v147 = vsel %vm144, %v146, %v142
      %v148 = vmul.f32 1.0, %v147
      %v149 = vld [vmem:[#allocation8] sm:$0xff]
      %v150 = vld [vmem:[#allocation9] sm:$0xff]
      %vm151 = vcmp.lt.f32.partialorder %v150, %v148
      %v152 = vsel %vm151, 1, 0
      %v153 = vcvt.s32.f32 %v152
      %v154 = vmul.f32 %v153, %v149
      %155 = vst.msk [vmem:[#allocation11] sm:$0xff] %vm87, %v154
    $region41: #{tpu_custom_call.1} parent=1 // pred_fallthru
      _
    // Predicated region
    $region42: #{tpu_custom_call.1} parent=1 // pred_check
      _
    $region43: #{tpu_custom_call.1} parent=1 // pred_check_branch
      %157 = sbr.rel (0) target = $region45
    $region44: #{tpu_custom_call.1} parent=1 // pred_region
      %159 = vsyncadd [#allocation5], 0
      %s161 = sshll.u32 [#allocation11], 4
      %s162 = int_to_ptr.vmem [resolvable:$true] %s161
      %s163 = sshll.u32 %s4, 4
      %s164 = int_to_ptr.hbm [resolvable:$true] %s163
      %166 = dma.vmem_to_hbm [thread:$0]  %s162, 128, %s164, [#allocation5]
    $region45: #{tpu_custom_call.1} parent=1 // pred_fallthru
      _
    // Predicated region
    $region46: #{tpu_custom_call.1} parent=1 // pred_check
      _
    $region47: #{tpu_custom_call.1} parent=1 // pred_check_branch
      %168 = sbr.rel (0) target = $region49
    $region48: #{tpu_custom_call.1} parent=1 // pred_region
      %170 = dma.done [#allocation5], 128
    $region49: #{tpu_custom_call.1} parent=1 // pred_fallthru
      _
    %171 = vsyncpa [#allocation4], 1
    %172 = vsyncpa [#allocation7], 1
    %173 = vsyncpa [#allocation10], 1
    %174 = vsyncpa [#allocation5], 1

</llo_original>
